<compile_context>
chip_gen: v7x
topology: tpu7x:2x2x1
jax: 0.10.0
libtpu: 0.0.40
codegen_flags: <defaults>
</compile_context>

<pallas_src>
import math
import functools

import jax
import jax.numpy as jnp
from jax.experimental import pallas as pl
from jax.experimental.pallas import tpu as pltpu


VMEM_LIMIT = 48 * 1024 * 1024


def _round_up(x, m):
    return ((x + m - 1) // m) * m


# ---------------------------------------------------------------------------
# Fast path (small graphs): one fused, fully-resident kernel.
# ---------------------------------------------------------------------------
def _fused_small_kernel(x_ref, w_ref, adj_ref, dinv_ref, b_ref, o_ref):
    s = jnp.dot(x_ref[...], w_ref[...], preferred_element_type=jnp.float32)
    s = s * dinv_ref[...]
    agg = jnp.dot(adj_ref[...], s, preferred_element_type=jnp.float32)
    o_ref[...] = (agg * dinv_ref[...] + b_ref[...]).astype(o_ref.dtype)


# ---------------------------------------------------------------------------
# Pass 1: s = dinv * (X @ W), stored in bf16 (row-tiled, lane-dense).
# ---------------------------------------------------------------------------
def _support_kernel(x_ref, w_ref, dinv_ref, s_ref):
    s = jnp.dot(x_ref[...], w_ref[...], preferred_element_type=jnp.float32)
    s_ref[...] = (s * dinv_ref[...]).astype(s_ref.dtype)


# ---------------------------------------------------------------------------
# Pass 2: out = dinv * (A @ s) + bias
#   - int8 adjacency tile (tm, tk) -> bf16 right before the MXU dot
#   - bf16 support fully resident in VMEM, sliced per k step
#   - f32 VMEM accumulator, init/finalize via pl.when
#   - all-zero adjacency tiles skipped (DMA re-pointed via tmap, dot gated)
# ---------------------------------------------------------------------------
def _aggregate_kernel(tk, tmap_ref, adj_ref, s_ref, dinv_ref, b_ref, o_ref,
                      acc_ref):
    i = pl.program_id(0)
    k = pl.program_id(1)

    @pl.when(k == 0)
    def _():
        acc_ref[...] = jnp.zeros_like(acc_ref)

    # tmap[i, k] == k  <=>  this tile may contain nonzeros (a false positive
    # can only occur for an actually-all-zero tile, which just adds 0).
    @pl.when(tmap_ref[i, k] == k)
    def _():
        # int8 0/1 -> f32 -> bf16 (exact); two-step cast keeps lowering simple,
        # cost hides under the adjacency DMA.
        adj = adj_ref[...].astype(jnp.float32).astype(jnp.bfloat16)
        off = pl.multiple_of(k * tk, tk)
        s_blk = s_ref[pl.ds(off, tk), :]
        acc_ref[...] += jnp.dot(adj, s_blk, preferred_element_type=jnp.float32)

    @pl.when(k == pl.num_programs(1) - 1)
    def _():
        o_ref[...] = (acc_ref[...] * dinv_ref[...] + b_ref[...]).astype(
            o_ref.dtype)


@jax.jit
def gcn_conv(x, weight, bias, adj_raw):
    """GCNConv forward: D^-1/2 A D^-1/2 (X W) + b (dense adjacency stand-in)."""
    N, c_in = x.shape
    c_out = weight.shape[1]
    if bias is None:
        bias = jnp.zeros((c_out,), jnp.float32)
    bias2d = jnp.reshape(bias, (1, c_out))

    # --- plain-JAX prep: degrees / symmetric norm factors --------------------
    deg = jnp.sum(adj_raw, axis=1, keepdims=True)                       # [N, 1]
    dinv = jnp.where(deg > 0.0, jax.lax.rsqrt(jnp.maximum(deg, 1e-12)), 0.0)

    ci_pad = _round_up(c_in, 128)
    co_pad = _round_up(c_out, 128)

    w_p = jnp.zeros((ci_pad, co_pad), jnp.float32).at[:c_in, :c_out].set(weight)
    b_p = jnp.zeros((1, co_pad), jnp.float32).at[:, :c_out].set(bias2d)

    # ------------------------- small-graph fast path --------------------------
    if N <= 1024:
        n_r = _round_up(N, 8)            # sublane padding only; lanes stay 128
        x_p = jnp.zeros((n_r, ci_pad), jnp.float32).at[:N, :c_in].set(x)
        dinv_p = jnp.zeros((n_r, 1), jnp.float32).at[:N].set(dinv)
        adj_p = jnp.zeros((n_r, n_r), jnp.float32).at[:N, :N].set(adj_raw)

        out_p = pl.pallas_call(
            _fused_small_kernel,
            out_shape=jax.ShapeDtypeStruct((n_r, co_pad), jnp.float32),
            grid_spec=pltpu.PrefetchScalarGridSpec(
                num_scalar_prefetch=0,
                grid=(1,),
                in_specs=[
                    pl.BlockSpec((n_r, ci_pad), lambda i: (0, 0)),
                    pl.BlockSpec((ci_pad, co_pad), lambda i: (0, 0)),
                    pl.BlockSpec((n_r, n_r), lambda i: (0, 0)),
                    pl.BlockSpec((n_r, 1), lambda i: (0, 0)),
                    pl.BlockSpec((1, co_pad), lambda i: (0, 0)),
                ],
                out_specs=pl.BlockSpec((n_r, co_pad), lambda i: (0, 0)),
            ),
            compiler_params=pltpu.CompilerParams(
                dimension_semantics=("arbitrary",),
                vmem_limit_bytes=VMEM_LIMIT,
            ),
        )(x_p, w_p, adj_p, dinv_p, b_p)
        return out_p[:N, :c_out]

    # ------------------------------ gridded path ------------------------------
    tm = 512
    tk = 1024
    # Pad to a multiple of 1024: divisible by tm and tk, and n_pad//tm is even
    # so the "parallel" row axis splits evenly across v7x's 2 TensorCores.
    n_pad = _round_up(N, 1024)
    n_i, n_k = n_pad // tm, n_pad // tk

    x_p = jnp.zeros((n_pad, ci_pad), jnp.float32).at[:N, :c_in].set(x)
    dinv_p = jnp.zeros((n_pad, 1), jnp.float32).at[:N].set(dinv)   # 0 on pad rows
    adj_i8 = (jnp.zeros((n_pad, n_pad), jnp.int8)
              .at[:N, :N].set(adj_raw.astype(jnp.int8)))           # 0/1 exact

    # Block-sparsity table: tmap[i, k] = index of last nonzero k-tile <= k in
    # row-tile i (0 if none). Empty tiles re-point at an already-fetched block
    # so their DMA is skipped; the kernel gates the dot on tmap[i, k] == k.
    nz = jnp.any(adj_i8.reshape(n_i, tm, n_k, tk) != 0, axis=(1, 3))
    ks = jnp.arange(n_k, dtype=jnp.int32)[None, :]
    last_nz = jax.lax.cummax(jnp.where(nz, ks, jnp.int32(-1)), axis=1)
    tile_map = jnp.maximum(last_nz, 0).astype(jnp.int32)            # (n_i, n_k)

    # --- pass 1: s = dinv * (X @ W)  (bf16 output) ----------------------------
    support = pl.pallas_call(
        _support_kernel,
        out_shape=jax.ShapeDtypeStruct((n_pad, co_pad), jnp.bfloat16),
        grid_spec=pltpu.PrefetchScalarGridSpec(
            num_scalar_prefetch=0,
            grid=(n_pad // tm,),
            in_specs=[
                pl.BlockSpec((tm, ci_pad), lambda i: (i, 0)),        # x rows
                pl.BlockSpec((ci_pad, co_pad), lambda i: (0, 0)),    # weight
                pl.BlockSpec((tm, 1), lambda i: (i, 0)),             # dinv rows
            ],
            out_specs=pl.BlockSpec((tm, co_pad), lambda i: (i, 0)),
        ),
        compiler_params=pltpu.CompilerParams(
            dimension_semantics=("parallel",),
            vmem_limit_bytes=VMEM_LIMIT,
        ),
    )(x_p, w_p, dinv_p)

    # --- pass 2: out = dinv * (A @ s) + b -------------------------------------
    out_p = pl.pallas_call(
        functools.partial(_aggregate_kernel, tk),
        out_shape=jax.ShapeDtypeStruct((n_pad, co_pad), jnp.float32),
        grid_spec=pltpu.PrefetchScalarGridSpec(
            num_scalar_prefetch=1,                                    # tile_map
            grid=(n_i, n_k),
            in_specs=[
                # adjacency tiles (int8); empty tiles re-pointed -> DMA skipped
                pl.BlockSpec((tm, tk), lambda i, k, tmap: (i, tmap[i, k])),
                # whole bf16 support resident in VMEM (constant block index)
                pl.BlockSpec((n_pad, co_pad), lambda i, k, tmap: (0, 0)),
                pl.BlockSpec((tm, 1), lambda i, k, tmap: (i, 0)),     # dinv rows
                pl.BlockSpec((1, co_pad), lambda i, k, tmap: (0, 0)), # bias
            ],
            out_specs=pl.BlockSpec((tm, co_pad), lambda i, k, tmap: (i, 0)),
            scratch_shapes=[pltpu.VMEM((tm, co_pad), jnp.float32)],   # f32 acc
        ),
        compiler_params=pltpu.CompilerParams(
            dimension_semantics=("parallel", "arbitrary"),
            vmem_limit_bytes=VMEM_LIMIT,
        ),
    )(tile_map, adj_i8, support, dinv_p, b_p)

    return out_p[:N, :c_out]


def edge_to_adj(num_nodes, edge_index):
    """Dense 0/1 adjacency with both edge directions and self loops (JAX glue)."""
    src, dst = edge_index[0], edge_index[1]
    adj = jnp.zeros((num_nodes, num_nodes), jnp.float32)
    adj = adj.at[src, dst].set(1.0)
    adj = adj.at[dst, src].set(1.0)
    adj = adj + jnp.eye(num_nodes, dtype=jnp.float32)
    return jnp.minimum(adj, 1.0)


def _run_case(key, N, C_IN, C_OUT, E, tol):
    k_x, k_w, k_b, k_e = jax.random.split(key, 4)

    # Deterministic parameter init mirroring reset_parameters():
    # uniform(-stdv, stdv) with stdv = 1/sqrt(out_channels).
    stdv = 1.0 / math.sqrt(C_OUT)
    weight = jax.random.uniform(k_w, (C_IN, C_OUT), jnp.float32, -stdv, stdv)
    bias = jax.random.uniform(k_b, (C_OUT,), jnp.float32, -stdv, stdv)

    x = jax.random.normal(k_x, (N, C_IN), jnp.float32)
    edge_index = jax.random.randint(k_e, (2, E), 0, N, jnp.int32)
    adj_raw = edge_to_adj(N, edge_index)

    out = jax.block_until_ready(gcn_conv(x, weight, bias, adj_raw))

    # Pure-JAX reference of the original module semantics.
    deg = adj_raw.sum(axis=1, keepdims=True)
    dinv = 1.0 / jnp.sqrt(jnp.maximum(deg, 1e-12))
    adj_n = adj_raw * dinv * dinv.T
    ref = adj_n @ (x @ weight) + bias.reshape(1, -1)
    err = float(jnp.max(jnp.abs(out - ref)))
    assert jnp.allclose(out, ref, atol=tol, rtol=tol), err


if __name__ == "__main__":
    key = jax.random.PRNGKey(0)
    k_small, k_big = jax.random.split(key)

    # Small graph -> fused fast path (f32 end to end, tight tolerance).
    _run_case(k_small, N=32, C_IN=16, C_OUT=8, E=64, tol=1e-4)

    # Larger graph -> gridded path (bf16 support, int8 adjacency, block skip).
    _run_case(k_big, N=1280, C_IN=64, C_OUT=32, E=6000, tol=2e-2)

    print("KERNEL_OK")
</pallas_src>

<mosaic_0001>
module attributes {stable_mosaic.version = 11 : i64} {
  func.func @_fused_small_kernel(%arg0: i32, %arg1: memref<32x128xf32, #tpu.memory_space<vmem>>, %arg2: memref<128x128xf32, #tpu.memory_space<vmem>>, %arg3: memref<32x32xf32, #tpu.memory_space<vmem>>, %arg4: memref<32x1xf32, #tpu.memory_space<vmem>>, %arg5: memref<1x128xf32, #tpu.memory_space<vmem>>, %arg6: memref<32x128xf32, #tpu.memory_space<vmem>>) attributes {dimension_semantics = [#tpu.dimension_semantics<arbitrary>], iteration_bounds = array<i64: 1>, scalar_prefetch = 0 : i64, scratch_operands = 0 : i64, tpu.core_type = #tpu.core_type<tc>, window_params = [{pipeline_mode = #tpu.pipeline_mode<synchronous>, transform_indices = @transform_0, window_bounds = array<i64: 32, 128>}, {pipeline_mode = #tpu.pipeline_mode<synchronous>, transform_indices = @transform_1, window_bounds = array<i64: 128, 128>}, {pipeline_mode = #tpu.pipeline_mode<synchronous>, transform_indices = @transform_2, window_bounds = array<i64: 32, 32>}, {pipeline_mode = #tpu.pipeline_mode<synchronous>, transform_indices = @transform_3, window_bounds = array<i64: 32, 1>}, {pipeline_mode = #tpu.pipeline_mode<synchronous>, transform_indices = @transform_4, window_bounds = array<i64: 1, 128>}, {pipeline_mode = #tpu.pipeline_mode<synchronous>, transform_indices = @transform_5, window_bounds = array<i64: 32, 128>}]} {
    %c0 = arith.constant 0 : index
    %c0_0 = arith.constant 0 : index
    %0 = vector.load %arg1[%c0, %c0_0] : memref<32x128xf32, #tpu.memory_space<vmem>>, vector<32x128xf32>
    %c0_1 = arith.constant 0 : index
    %c0_2 = arith.constant 0 : index
    %1 = vector.load %arg2[%c0_1, %c0_2] : memref<128x128xf32, #tpu.memory_space<vmem>>, vector<128x128xf32>
    %cst = arith.constant dense<0.000000e+00> : vector<32x128xf32>
    %2 = tpu.matmul %0, %1, %cst {dimension_numbers = #tpu.dot_dimension_numbers<[1], [0], [0], [1], [0, 0, 1, 1], [], []>} : vector<32x128xf32>, vector<128x128xf32>, vector<32x128xf32> -> vector<32x128xf32>
    %c0_3 = arith.constant 0 : index
    %c0_4 = arith.constant 0 : index
    %3 = vector.load %arg4[%c0_3, %c0_4] : memref<32x1xf32, #tpu.memory_space<vmem>>, vector<32x1xf32>
    %4 = vector.broadcast %3 : vector<32x1xf32> to vector<32x128xf32>
    %5 = arith.mulf %2, %4 : vector<32x128xf32>
    %c0_5 = arith.constant 0 : index
    %c0_6 = arith.constant 0 : index
    %6 = vector.load %arg3[%c0_5, %c0_6] : memref<32x32xf32, #tpu.memory_space<vmem>>, vector<32x32xf32>
    %cst_7 = arith.constant dense<0.000000e+00> : vector<32x128xf32>
    %7 = tpu.matmul %6, %5, %cst_7 {dimension_numbers = #tpu.dot_dimension_numbers<[1], [0], [0], [1], [0, 0, 1, 1], [], []>} : vector<32x32xf32>, vector<32x128xf32>, vector<32x128xf32> -> vector<32x128xf32>
    %c0_8 = arith.constant 0 : index
    %c0_9 = arith.constant 0 : index
    %8 = vector.load %arg4[%c0_8, %c0_9] : memref<32x1xf32, #tpu.memory_space<vmem>>, vector<32x1xf32>
    %9 = vector.broadcast %8 : vector<32x1xf32> to vector<32x128xf32>
    %10 = arith.mulf %7, %9 : vector<32x128xf32>
    %c0_10 = arith.constant 0 : index
    %c0_11 = arith.constant 0 : index
    %11 = vector.load %arg5[%c0_10, %c0_11] : memref<1x128xf32, #tpu.memory_space<vmem>>, vector<1x128xf32>
    %12 = vector.broadcast %11 : vector<1x128xf32> to vector<32x128xf32>
    %13 = arith.addf %10, %12 : vector<32x128xf32>
    %c0_12 = arith.constant 0 : index
    %c0_13 = arith.constant 0 : index
    %14 = vector.load %arg6[%c0_12, %c0_13] : memref<32x128xf32, #tpu.memory_space<vmem>>, vector<32x128xf32>
    tpu.vector_store %arg6[%c0_12, %c0_13], %13 {strides = array<i32>} : memref<32x128xf32, #tpu.memory_space<vmem>>, vector<32x128xf32>,
    return
  }
  func.func @transform_0(%arg0: i32) -> (i32, i32) {
    %c0_i32 = arith.constant 0 : i32
    %c0_i32_0 = arith.constant 0 : i32
    %c0_i32_1 = arith.constant 0 : i32
    return %c0_i32, %c0_i32_0 : i32, i32
  }
  func.func @transform_1(%arg0: i32) -> (i32, i32) {
    %c0_i32 = arith.constant 0 : i32
    %c0_i32_0 = arith.constant 0 : i32
    %c0_i32_1 = arith.constant 0 : i32
    return %c0_i32, %c0_i32_0 : i32, i32
  }
  func.func @transform_2(%arg0: i32) -> (i32, i32) {
    %c0_i32 = arith.constant 0 : i32
    %c0_i32_0 = arith.constant 0 : i32
    %c0_i32_1 = arith.constant 0 : i32
    return %c0_i32, %c0_i32_0 : i32, i32
  }
  func.func @transform_3(%arg0: i32) -> (i32, i32) {
    %c0_i32 = arith.constant 0 : i32
    %c0_i32_0 = arith.constant 0 : i32
    %c0_i32_1 = arith.constant 0 : i32
    return %c0_i32, %c0_i32_0 : i32, i32
  }
  func.func @transform_4(%arg0: i32) -> (i32, i32) {
    %c0_i32 = arith.constant 0 : i32
    %c0_i32_0 = arith.constant 0 : i32
    %c0_i32_1 = arith.constant 0 : i32
    return %c0_i32, %c0_i32_0 : i32, i32
  }
  func.func @transform_5(%arg0: i32) -> (i32, i32) {
    %c0_i32 = arith.constant 0 : i32
    %c0_i32_0 = arith.constant 0 : i32
    %c0_i32_1 = arith.constant 0 : i32
    return %c0_i32, %c0_i32_0 : i32, i32
  }
}

</mosaic_0001>

<llo_original>
// kernel: gcn_conv.1
$region0: #{gcn_conv.1}
  #allocation0 [shape = 'u32[]', space=smem, size = 0x4, offset = 0x4, fixed_abs, tag = 'smem constant byte address 0x4 - core index']
  #allocation1 [shape = 'u32[144,128]{1,0:T(1,128)}', space=vmem, size = 0x12000, scoped, tag = 'internal scratch']
  %s0 = inlined_call_operand.vmem [shape: f32[32,128], index: 0, kind: input, shape index: {}]
  %s1 = inlined_call_operand.vmem [shape: f32[128,128], index: 1, kind: input, shape index: {}]
  %s2 = inlined_call_operand.vmem [shape: f32[32,32], index: 2, kind: input, shape index: {}]
  %s3 = inlined_call_operand.vmem [shape: f32[32,1], index: 3, kind: input, shape index: {}]
  %s4 = inlined_call_operand.vmem [shape: f32[1,128], index: 4, kind: input, shape index: {}]
  %s5 = inlined_call_operand.vmem [shape: f32[32,128], index: 5, kind: output, shape index: {}]
  %s6 = sld [smem:[#allocation0]]
  $region30: #{gcn_conv.1} parent=0
    _
  %s8 = ssub.s32 1, %s6
  %s9 = scalar_select 0, %s8, %s6
  // Predicated region
  $region2: #{gcn_conv.1} parent=0 // pred_check
    _
  $region3: #{gcn_conv.1} parent=0 // pred_check_branch
    %11 = sbr.rel (0) target = $region5
  $region4: #{gcn_conv.1} parent=0 // pred_region
    _
  $region5: #{gcn_conv.1} parent=0 // pred_fallthru
    _
  // Predicated region
  $region6: #{gcn_conv.1} parent=0 // pred_check
    _
  $region7: #{gcn_conv.1} parent=0 // pred_check_branch
    %13 = sbr.rel (0) target = $region9
  $region8: #{gcn_conv.1} parent=0 // pred_region
    _
  $region9: #{gcn_conv.1} parent=0 // pred_fallthru
    _
  // Predicated region
  $region10: #{gcn_conv.1} parent=0 // pred_check
    _
  $region11: #{gcn_conv.1} parent=0 // pred_check_branch
    %15 = sbr.rel (0) target = $region13
  $region12: #{gcn_conv.1} parent=0 // pred_region
    _
  $region13: #{gcn_conv.1} parent=0 // pred_fallthru
    _
  // Predicated region
  $region14: #{gcn_conv.1} parent=0 // pred_check
    _
  $region15: #{gcn_conv.1} parent=0 // pred_check_branch
    %17 = sbr.rel (0) target = $region17
  $region16: #{gcn_conv.1} parent=0 // pred_region
    _
  $region17: #{gcn_conv.1} parent=0 // pred_fallthru
    _
  // Predicated region
  $region18: #{gcn_conv.1} parent=0 // pred_check
    _
  $region19: #{gcn_conv.1} parent=0 // pred_check_branch
    %19 = sbr.rel (0) target = $region21
  $region20: #{gcn_conv.1} parent=0 // pred_region
    _
  $region21: #{gcn_conv.1} parent=0 // pred_fallthru
    _
  %v20 = vld [vmem:[%s0] sm:$0xff]
  %v21 = vld [vmem:[%s0 + $0x8] sm:$0xff]
  %v22 = vld [vmem:[%s0 + $0x10] sm:$0xff]
  %v23 = vld [vmem:[%s0 + $0x18] sm:$0xff]
  %v24 = vld [vmem:[%s1] sm:$0xff]
  %v25 = vld [vmem:[%s1 + $0x8] sm:$0xff]
  %v26 = vld [vmem:[%s1 + $0x10] sm:$0xff]
  %v27 = vld [vmem:[%s1 + $0x18] sm:$0xff]
  %v28 = vld [vmem:[%s1 + $0x20] sm:$0xff]
  %v29 = vld [vmem:[%s1 + $0x28] sm:$0xff]
  %v30 = vld [vmem:[%s1 + $0x30] sm:$0xff]
  %v31 = vld [vmem:[%s1 + $0x38] sm:$0xff]
  %v32 = vld [vmem:[%s1 + $0x40] sm:$0xff]
  %v33 = vld [vmem:[%s1 + $0x48] sm:$0xff]
  %v34 = vld [vmem:[%s1 + $0x50] sm:$0xff]
  %v35 = vld [vmem:[%s1 + $0x58] sm:$0xff]
  %v36 = vld [vmem:[%s1 + $0x60] sm:$0xff]
  %v37 = vld [vmem:[%s1 + $0x68] sm:$0xff]
  %v38 = vld [vmem:[%s1 + $0x70] sm:$0xff]
  %v39 = vld [vmem:[%s1 + $0x78] sm:$0xff]
  %40 = vmatprep.subr.mxu0 0.0
  %41 = vmatpush1.msra.mxu0 %v24
  %42 = vmatprep.subr.mxu0 0.0
  %43 = vmatpush1.msra.mxu0 %v25
  %44 = vmatprep.subr.mxu0 0.0
  %45 = vmatpush1.msra.mxu0 %v26
  %46 = vmatprep.subr.mxu0 0.0
  %47 = vmatpush1.msra.mxu0 %v27
  %48 = vmatprep.subr.mxu0 0.0
  %49 = vmatpush1.msra.mxu0 %v28
  %50 = vmatprep.subr.mxu0 0.0
  %51 = vmatpush1.msra.mxu0 %v29
  %52 = vmatprep.subr.mxu0 0.0
  %53 = vmatpush1.msra.mxu0 %v30
  %54 = vmatprep.subr.mxu0 0.0
  %55 = vmatpush1.msra.mxu0 %v31
  %56 = vmatprep.subr.mxu0 0.0
  %57 = vmatpush1.msra.mxu0 %v32
  %58 = vmatprep.subr.mxu0 0.0
  %59 = vmatpush1.msra.mxu0 %v33
  %60 = vmatprep.subr.mxu0 0.0
  %61 = vmatpush1.msra.mxu0 %v34
  %62 = vmatprep.subr.mxu0 0.0
  %63 = vmatpush1.msra.mxu0 %v35
  %64 = vmatprep.subr.mxu0 0.0
  %65 = vmatpush1.msra.mxu0 %v36
  %66 = vmatprep.subr.mxu0 0.0
  %67 = vmatpush1.msra.mxu0 %v37
  %68 = vmatprep.subr.mxu0 0.0
  %69 = vmatpush1.msra.mxu0 %v38
  %70 = vmatprep.subr.mxu0 0.0
  %71 = vmatpush1.msra.mxu0 %v39
  %72 = vmatprep.subr.mxu0 0.0
  %73 = vmatpush1.msra.mxu0 0.0
  %74 = vmatprep.subr.mxu0 0.0
  %75 = vmatpush1.msra.mxu0 0.0
  %76 = vmatprep.subr.mxu0 0.0
  %77 = vmatpush1.msra.mxu0 0.0
  %78 = vmatprep.subr.mxu0 0.0
  %79 = vmatpush1.msra.mxu0 0.0
  %80 = vmatprep.subr.mxu0 0.0
  %81 = vmatpush1.msra.mxu0 0.0
  %82 = vmatprep.subr.mxu0 0.0
  %83 = vmatpush1.msra.mxu0 0.0
  %84 = vmatprep.subr.mxu0 0.0
  %85 = vmatpush1.msra.mxu0 0.0
  %86 = vmatprep.subr.mxu0 0.0
  %87 = vmatpush1.msra.mxu0 0.0
  %88 = vmatprep.subr.mxu0 0.0
  %89 = vmatpush1.msra.mxu0 0.0
  %90 = vmatprep.subr.mxu0 0.0
  %91 = vmatpush1.msra.mxu0 0.0
  %92 = vmatprep.subr.mxu0 0.0
  %93 = vmatpush1.msra.mxu0 0.0
  %94 = vmatprep.subr.mxu0 0.0
  %95 = vmatpush1.msra.mxu0 0.0
  %96 = vmatprep.subr.mxu0 0.0
  %97 = vmatpush1.msra.mxu0 0.0
  %98 = vmatprep.subr.mxu0 0.0
  %99 = vmatpush1.msra.mxu0 0.0
  %100 = vmatprep.subr.mxu0 0.0
  %101 = vmatpush1.msra.mxu0 0.0
  %102 = vmatprep.subr.mxu0 0.0
  %103 = vmatpush1.msra.mxu0 0.0
  %104 = vmatprep.mubr.f32.mxu0 0.0
  %105 = vmatmul.mubr.f32.gmra.mrb[0].mxu0 %v20
  %v106 = vpop.f32.mrb[0].mxu0
  %v107 = vadd.f32 0.0, %v106
  %v108 = vpop.f32.mrb[0].mxu0
  %109 = vmatprep.mubr.f32.mxu0 0.0
  %110 = vmatmul.mubr.f32.gmra.mrb[0].mxu0 %v21
  %v111 = vpop.f32.mrb[0].mxu0
  %v112 = vadd.f32 0.0, %v111
  %v113 = vpop.f32.mrb[0].mxu0
  %114 = vmatprep.mubr.f32.mxu0 0.0
  %115 = vmatmul.mubr.f32.gmra.mrb[0].mxu0 %v22
  %v116 = vpop.f32.mrb[0].mxu0
  %v117 = vadd.f32 0.0, %v116
  %v118 = vpop.f32.mrb[0].mxu0
  %119 = vmatprep.mubr.f32.mxu0 0.0
  %120 = vmatmul.mubr.f32.gmra.mrb[0].mxu0 %v23
  %v121 = vpop.f32.mrb[0].mxu0
  %v122 = vadd.f32 0.0, %v121
  %v123 = vpop.f32.mrb[0].mxu0
  %124 = vdwg.mxu0
  %v125 = vld [vmem:[%s3] sm:$0xff]
  %v126 = vld [vmem:[%s3 + $0x8] sm:$0xff]
  %v127 = vld [vmem:[%s3 + $0x10] sm:$0xff]
  %v128 = vld [vmem:[%s3 + $0x18] sm:$0xff]
  %130 = vset.pattern.permute.xlu0 0
  %131 = vperm.xlu0 %130, %v125
  %v132 = vpop.permute.xlu0 %131
  %135 = vset.pattern.permute.xlu0 0
  %136 = vperm.xlu0 %135, %v126
  %v137 = vpop.permute.xlu0 %136
  %140 = vset.pattern.permute.xlu0 0
  %141 = vperm.xlu0 %140, %v127
  %v142 = vpop.permute.xlu0 %141
  %145 = vset.pattern.permute.xlu0 0
  %146 = vperm.xlu0 %145, %v128
  %v147 = vpop.permute.xlu0 %146
  %v149 = vmul.f32 %v107, %v132
  %v150 = vmul.f32 %v112, %v137
  %v151 = vmul.f32 %v117, %v142
  %v152 = vmul.f32 %v122, %v147
  %v153 = vld [vmem:[%s2] sm:$0xff]
  %v154 = vld [vmem:[%s2 + $0x8] sm:$0xff]
  %v155 = vld [vmem:[%s2 + $0x10] sm:$0xff]
  %v156 = vld [vmem:[%s2 + $0x18] sm:$0xff]
  %vm157 = vcmask 261120
  %v159 = vsel %vm157, %v153, 0
  %v162 = vsel %vm157, %v154, 0
  %v165 = vsel %vm157, %v155, 0
  %v168 = vsel %vm157, %v156, 0
  %170 = vmatprep.subr.mxu0 0.0
  %171 = vmatpush1.msra.mxu0 %v149
  %172 = vmatprep.subr.mxu0 0.0
  %173 = vmatpush1.msra.mxu0 %v150
  %174 = vmatprep.subr.mxu0 0.0
  %175 = vmatpush1.msra.mxu0 %v151
  %176 = vmatprep.subr.mxu0 0.0
  %177 = vmatpush1.msra.mxu0 %v152
  %178 = vmatprep.subr.mxu0 0.0
  %179 = vmatpush1.msra.mxu0 0.0
  %180 = vmatprep.subr.mxu0 0.0
  %181 = vmatpush1.msra.mxu0 0.0
  %182 = vmatprep.subr.mxu0 0.0
  %183 = vmatpush1.msra.mxu0 0.0
  %184 = vmatprep.subr.mxu0 0.0
  %185 = vmatpush1.msra.mxu0 0.0
  %186 = vmatprep.subr.mxu0 0.0
  %187 = vmatpush1.msra.mxu0 0.0
  %188 = vmatprep.subr.mxu0 0.0
  %189 = vmatpush1.msra.mxu0 0.0
  %190 = vmatprep.subr.mxu0 0.0
  %191 = vmatpush1.msra.mxu0 0.0
  %192 = vmatprep.subr.mxu0 0.0
  %193 = vmatpush1.msra.mxu0 0.0
  %194 = vmatprep.subr.mxu0 0.0
  %195 = vmatpush1.msra.mxu0 0.0
  %196 = vmatprep.subr.mxu0 0.0
  %197 = vmatpush1.msra.mxu0 0.0
  %198 = vmatprep.subr.mxu0 0.0
  %199 = vmatpush1.msra.mxu0 0.0
  %200 = vmatprep.subr.mxu0 0.0
  %201 = vmatpush1.msra.mxu0 0.0
  %202 = vmatprep.subr.mxu0 0.0
  %203 = vmatpush1.msra.mxu0 0.0
  %204 = vmatprep.subr.mxu0 0.0
  %205 = vmatpush1.msra.mxu0 0.0
  %206 = vmatprep.subr.mxu0 0.0
  %207 = vmatpush1.msra.mxu0 0.0
  %208 = vmatprep.subr.mxu0 0.0
  %209 = vmatpush1.msra.mxu0 0.0
  %210 = vmatprep.subr.mxu0 0.0
  %211 = vmatpush1.msra.mxu0 0.0
  %212 = vmatprep.subr.mxu0 0.0
  %213 = vmatpush1.msra.mxu0 0.0
  %214 = vmatprep.subr.mxu0 0.0
  %215 = vmatpush1.msra.mxu0 0.0
  %216 = vmatprep.subr.mxu0 0.0
  %217 = vmatpush1.msra.mxu0 0.0
  %218 = vmatprep.subr.mxu0 0.0
  %219 = vmatpush1.msra.mxu0 0.0
  %220 = vmatprep.subr.mxu0 0.0
  %221 = vmatpush1.msra.mxu0 0.0
  %222 = vmatprep.subr.mxu0 0.0
  %223 = vmatpush1.msra.mxu0 0.0
  %224 = vmatprep.subr.mxu0 0.0
  %225 = vmatpush1.msra.mxu0 0.0
  %226 = vmatprep.subr.mxu0 0.0
  %227 = vmatpush1.msra.mxu0 0.0
  %228 = vmatprep.subr.mxu0 0.0
  %229 = vmatpush1.msra.mxu0 0.0
  %230 = vmatprep.subr.mxu0 0.0
  %231 = vmatpush1.msra.mxu0 0.0
  %232 = vmatprep.subr.mxu0 0.0
  %233 = vmatpush1.msra.mxu0 0.0
  %234 = vmatprep.mubr.f32.mxu0 0.0
  %235 = vmatmul.mubr.f32.gmra.mrb[0].mxu0 %v159
  %v236 = vpop.f32.mrb[0].mxu0
  %v237 = vadd.f32 0.0, %v236
  %v238 = vpop.f32.mrb[0].mxu0
  %239 = vmatprep.mubr.f32.mxu0 0.0
  %240 = vmatmul.mubr.f32.gmra.mrb[0].mxu0 %v162
  %v241 = vpop.f32.mrb[0].mxu0
  %v242 = vadd.f32 0.0, %v241
  %v243 = vpop.f32.mrb[0].mxu0
  %244 = vmatprep.mubr.f32.mxu0 0.0
  %245 = vmatmul.mubr.f32.gmra.mrb[0].mxu0 %v165
  %v246 = vpop.f32.mrb[0].mxu0
  %v247 = vadd.f32 0.0, %v246
  %v248 = vpop.f32.mrb[0].mxu0
  %249 = vmatprep.mubr.f32.mxu0 0.0
  %250 = vmatmul.mubr.f32.gmra.mrb[0].mxu0 %v168
  %v251 = vpop.f32.mrb[0].mxu0
  %v252 = vadd.f32 0.0, %v251
  %v253 = vpop.f32.mrb[0].mxu0
  %254 = vdwg.mxu0
  %v255 = vmul.f32 %v237, %v132
  %v256 = vmul.f32 %v242, %v137
  %v257 = vmul.f32 %v247, %v142
  %v258 = vmul.f32 %v252, %v147
  %v259 = vld [vmem:[%s4] sm:$0x1]
  %v261 = vlaneseq
  %v262 = vshrl.u32 %v261, 7
  %v263 = vsub.s32 0, %v262
  %v264 = vrot.slane %v259, %v263
  %v266 = vadd.f32 %v255, %v264
  %v267 = vadd.f32 %v256, %v264
  %v268 = vadd.f32 %v257, %v264
  %v269 = vadd.f32 %v258, %v264
  %270 = vst [vmem:[%s5] sm:$0xff] %v266
  %271 = vst [vmem:[%s5 + $0x8] sm:$0xff] %v267
  %272 = vst [vmem:[%s5 + $0x10] sm:$0xff] %v268
  %273 = vst [vmem:[%s5 + $0x18] sm:$0xff] %v269
  // Predicated region
  $region22: #{gcn_conv.1} parent=0 // pred_check
    _
  $region23: #{gcn_conv.1} parent=0 // pred_check_branch
    %275 = sbr.rel (0) target = $region25
  $region24: #{gcn_conv.1} parent=0 // pred_region
    _
  $region25: #{gcn_conv.1} parent=0 // pred_fallthru
    _
  // Predicated region
  $region26: #{gcn_conv.1} parent=0 // pred_check
    _
  $region27: #{gcn_conv.1} parent=0 // pred_check_branch
    %277 = sbr.rel (0) target = $region29
  $region28: #{gcn_conv.1} parent=0 // pred_region
    _
  $region29: #{gcn_conv.1} parent=0 // pred_fallthru
    _

</llo_original>
